<compile_context>
chip_gen: v6e
topology: v6e:2x2x1
jax: 0.10.0
libtpu: 0.0.40
codegen_flags: <defaults>
</compile_context>

<pallas_src>
import functools

import numpy as np
import jax
import jax.numpy as jnp
from jax.experimental import pallas as pl
from jax.experimental.pallas import tpu as pltpu

_LANE = 128  # lane (last-dim) granularity; also used for the node dim now


def _round_up(x, m):
    return (x + m - 1) // m * m


def _pad2d(a, rows, cols):
    r, c = a.shape
    return jnp.pad(a, ((0, rows - r), (0, cols - c)))


def _pick_tile(n, candidates):
    for c in candidates:
        if n % c == 0:
            return c
    return _LANE  # n is always a multiple of 128


# ---------------------------------------------------------------------------
# Fused single-block kernel (small graphs): all conv layers + classifier
# ---------------------------------------------------------------------------
def fused_gcn_kernel(*refs, num_conv, agg_first):
    """refs = (adj, x, w0, b0, ..., w_{L-1}, b_{L-1}, lin_w, lin_b, out).

    adj / x / W / lin_w arrive already cast to the compute dtype (bf16 by default);
    biases are f32 and the bias+ReLU epilogue runs in f32.  Padded feature lanes are
    zero, so ReLU keeps them exactly zero and layers chain correctly in one kernel.
    """
    adj_ref, x_ref = refs[0], refs[1]
    o_ref = refs[-1]
    p_refs = refs[2:-1]
    cdt = adj_ref.dtype

    adj = adj_ref[...]
    h = x_ref[...]
    for i in range(num_conv):
        w = p_refs[2 * i][...]
        b = p_refs[2 * i + 1][...]                      # (1, f_out_pad), f32
        if agg_first[i]:
            # A_hat @ X first: the N^2 matmul contracts over the smaller PADDED dim.
            t = jnp.dot(adj, h, preferred_element_type=jnp.float32)
            z = jnp.dot(t.astype(cdt), w, preferred_element_type=jnp.float32)
        else:
            # X @ W first.
            t = jnp.dot(h, w, preferred_element_type=jnp.float32)
            z = jnp.dot(adj, t.astype(cdt), preferred_element_type=jnp.float32)
        h = jnp.maximum(z + b, 0.0).astype(cdt)         # f32 epilogue, then back to cdt

    lin_w = p_refs[-2][...]
    lin_b = p_refs[-1][...]
    out = jnp.dot(h, lin_w, preferred_element_type=jnp.float32) + lin_b
    o_ref[...] = out.astype(o_ref.dtype)


def _fused_forward(adj_p, x_p, conv_wps, conv_bps, lin_wp, lin_bp, n_pad, pdims, agg_first):
    inputs = [adj_p, x_p]
    for w, b in zip(conv_wps, conv_bps):
        inputs += [w, b]
    inputs += [lin_wp, lin_bp]

    in_specs = [pl.BlockSpec(a.shape, lambda: (0, 0)) for a in inputs]
    out_cols = pdims[-1]

    # Explicit VMEM limit (v6e/v5e scoped defaults are 32/16 MiB << physical).
    in_bytes = sum(int(a.size) * a.dtype.itemsize for a in inputs)
    out_bytes = n_pad * out_cols * 4
    act_bytes = 2 * n_pad * max(pdims) * 4
    vmem_limit = int(min(64 << 20,
                         max(32 << 20, 2 * (in_bytes + out_bytes) + act_bytes + (2 << 20))))

    kernel = functools.partial(fused_gcn_kernel, num_conv=len(conv_wps), agg_first=agg_first)
    return pl.pallas_call(
        kernel,
        out_shape=jax.ShapeDtypeStruct((n_pad, out_cols), jnp.float32),
        in_specs=in_specs,
        out_specs=pl.BlockSpec((n_pad, out_cols), lambda: (0, 0)),
        compiler_params=pltpu.CompilerParams(vmem_limit_bytes=vmem_limit),
    )(*inputs)


# ---------------------------------------------------------------------------
# Row x K tiled GCNConv layer kernel (larger graphs)
#   acc(tile_m, f_in) += adj(tile_m, tile_k) @ h(tile_k, f_in)   over k
#   epilogue: ReLU(acc @ W + b)  [optionally  @ lin_w + lin_b  for the last layer]
# ---------------------------------------------------------------------------
def gcn_conv_tiled_kernel(*refs, tile_k, fuse_linear):
    if fuse_linear:
        adj_ref, h_ref, w_ref, b_ref, lw_ref, lb_ref, o_ref, acc_ref = refs
    else:
        adj_ref, h_ref, w_ref, b_ref, o_ref, acc_ref = refs
    k = pl.program_id(1)

    @pl.when(k == 0)
    def _():
        acc_ref[...] = jnp.zeros_like(acc_ref)

    off = pl.multiple_of(k * tile_k, _LANE)
    h_blk = h_ref[pl.ds(off, tile_k), :]                 # resident h, sliced per k-step
    acc_ref[...] += jnp.dot(adj_ref[...], h_blk, preferred_element_type=jnp.float32)

    @pl.when(k == pl.num_programs(1) - 1)
    def _():
        z = jnp.dot(acc_ref[...].astype(w_ref.dtype), w_ref[...],
                    preferred_element_type=jnp.float32)
        h_out = jnp.maximum(z + b_ref[...], 0.0)         # f32 bias + ReLU epilogue
        if fuse_linear:
            out = jnp.dot(h_out.astype(lw_ref.dtype), lw_ref[...],
                          preferred_element_type=jnp.float32) + lb_ref[...]
            o_ref[...] = out.astype(o_ref.dtype)
        else:
            o_ref[...] = h_out.astype(o_ref.dtype)


def _tiled_conv_layer(adj_p, h_p, w_p, b_p, lin=None, *, tile_m, tile_k, out_dtype):
    n_pad = adj_p.shape[0]
    f_in = h_p.shape[1]
    f_out = w_p.shape[1]
    cdt = adj_p.dtype

    inputs = [adj_p, h_p, w_p, b_p]
    in_specs = [
        pl.BlockSpec((tile_m, tile_k), lambda i, k: (i, k)),   # adj streams per grid step
        pl.BlockSpec((n_pad, f_in), lambda i, k: (0, 0)),      # h resident in VMEM
        pl.BlockSpec((f_in, f_out), lambda i, k: (0, 0)),      # W resident
        pl.BlockSpec((1, f_out), lambda i, k: (0, 0)),         # b resident (f32)
    ]
    if lin is not None:
        lin_wp, lin_bp = lin
        out_cols = lin_wp.shape[1]
        inputs += [lin_wp, lin_bp]
        in_specs += [
            pl.BlockSpec((f_out, out_cols), lambda i, k: (0, 0)),
            pl.BlockSpec((1, out_cols), lambda i, k: (0, 0)),
        ]
    else:
        out_cols = f_out

    itemsize = np.dtype(cdt).itemsize
    resident = (n_pad * f_in + f_in * f_out) * itemsize + f_out * 4
    if lin is not None:
        resident += f_out * out_cols * itemsize + out_cols * 4
    streamed = 2 * tile_m * tile_k * itemsize                  # double-buffered adj tiles
    out_b = 2 * tile_m * out_cols * np.dtype(out_dtype).itemsize
    acc_b = tile_m * f_in * 4
    vmem_limit = int(min(64 << 20,
                         max(32 << 20, 2 * resident + streamed + out_b + acc_b + (2 << 20))))

    kernel = functools.partial(gcn_conv_tiled_kernel, tile_k=tile_k,
                               fuse_linear=lin is not None)
    return pl.pallas_call(
        kernel,
        out_shape=jax.ShapeDtypeStruct((n_pad, out_cols), out_dtype),
        grid_spec=pltpu.PrefetchScalarGridSpec(
            num_scalar_prefetch=0,
            grid=(n_pad // tile_m, n_pad // tile_k),
            in_specs=in_specs,
            out_specs=pl.BlockSpec((tile_m, out_cols), lambda i, k: (i, 0)),
            scratch_shapes=[pltpu.VMEM((tile_m, f_in), jnp.float32)],
        ),
        compiler_params=pltpu.CompilerParams(
            dimension_semantics=("parallel", "arbitrary"),   # row tiles shard across TCs (v7x)
            vmem_limit_bytes=vmem_limit,
        ),
    )(*inputs)


# ---------------------------------------------------------------------------
# Graph preprocessing (plain JAX): dense normalized adjacency, PyG gcn_norm semantics
# ---------------------------------------------------------------------------
def normalized_adjacency(edge_index, num_nodes):
    src, dst = edge_index[0], edge_index[1]
    a = jnp.zeros((num_nodes, num_nodes), jnp.float32)
    a = a.at[dst, src].add(1.0)                       # scatter-ADD (duplicate edges accumulate)
    diag = jnp.diagonal(a)
    a = a + jnp.diag(jnp.where(diag > 0.0, 0.0, 1.0))  # add_remaining_self_loops
    deg = jnp.sum(a, axis=1)
    d_inv_sqrt = jnp.where(deg > 0, 1.0 / jnp.sqrt(deg), 0.0)
    return d_inv_sqrt[:, None] * a * d_inv_sqrt[None, :]


# ---------------------------------------------------------------------------
# GCN model
# ---------------------------------------------------------------------------
def init_gcn_params(key, in_channels, n_classes, hidden_layers):
    if not hidden_layers:
        # torch branch: GCNConv(in_channels, in_channels) then Linear(in_channels, n_classes)
        hidden_layers = [in_channels]
    dims = [in_channels] + list(hidden_layers)
    params = {"conv_w": [], "conv_b": []}
    for i in range(len(hidden_layers)):
        key, kw = jax.random.split(key)
        fan_in, fan_out = dims[i], dims[i + 1]
        scale = jnp.sqrt(6.0 / (fan_in + fan_out))    # glorot, like GCNConv default
        params["conv_w"].append(
            jax.random.uniform(kw, (fan_in, fan_out), jnp.float32, -scale, scale))
        params["conv_b"].append(jnp.zeros((fan_out,), jnp.float32))
    key, kw, kb = jax.random.split(key, 3)
    fan_in = dims[-1]
    bound = 1.0 / jnp.sqrt(fan_in)
    params["lin_w"] = jax.random.uniform(kw, (fan_in, n_classes), jnp.float32, -bound, bound)
    params["lin_b"] = jax.random.uniform(kb, (n_classes,), jnp.float32, -bound, bound)
    return params


def gcn_forward(params, x, edge_index, num_nodes, *,
                compute_dtype=jnp.bfloat16, max_fused_nodes=512):
    """Forward pass of the GCN module (conv stack + ReLUs + final linear).

    compute_dtype=bfloat16 halves adjacency/activation bytes and runs the MXU at its
    native rate (accumulation stays f32, bias+ReLU epilogue stays f32).  Pass
    jnp.float32 to match the PyTorch reference more tightly.
    """
    adj = normalized_adjacency(edge_index, num_nodes)

    conv_ws, conv_bs = params["conv_w"], params["conv_b"]
    lin_w, lin_b = params["lin_w"], params["lin_b"]
    num_conv = len(conv_ws)

    n = num_nodes
    n_classes = lin_w.shape[1]
    n_pad = _round_up(n, _LANE)   # node dim padded to 128 lanes (adj lane/contraction axis)

    dims = [x.shape[1]] + [w.shape[1] for w in conv_ws] + [n_classes]
    pdims = [_round_up(d, _LANE) for d in dims]

    # Pad + cast in the wrapper so the DMAs move compute_dtype bytes; biases stay f32.
    adj_p = _pad2d(adj, n_pad, n_pad).astype(compute_dtype)
    x_p = _pad2d(x.astype(jnp.float32), n_pad, pdims[0]).astype(compute_dtype)
    conv_wps = [_pad2d(conv_ws[i], pdims[i], pdims[i + 1]).astype(compute_dtype)
                for i in range(num_conv)]
    conv_bps = [_pad2d(conv_bs[i].reshape(1, -1).astype(jnp.float32), 1, pdims[i + 1])
                for i in range(num_conv)]
    lin_wp = _pad2d(lin_w, pdims[-2], pdims[-1]).astype(compute_dtype)
    lin_bp = _pad2d(lin_b.reshape(1, -1).astype(jnp.float32), 1, pdims[-1])

    if n_pad <= max_fused_nodes:
        # Small graph: one fused pallas_call. Matmul ordering decided on PADDED dims
        # (that is the cost actually paid inside the kernel).
        agg_first = tuple(bool(pdims[i] < pdims[i + 1]) for i in range(num_conv))
        out_p = _fused_forward(adj_p, x_p, conv_wps, conv_bps, lin_wp, lin_bp,
                               n_pad, pdims, agg_first)
    else:
        # Larger graph: per-layer row x K tiled aggregation (adj streamed, rest resident).
        tile_m = _pick_tile(n_pad, (256, 128))
        tile_k = _pick_tile(n_pad, (512, 256, 128))
        h = x_p
        out_p = None
        for i in range(num_conv):
            last = i == num_conv - 1
            res = _tiled_conv_layer(
                adj_p, h, conv_wps[i], conv_bps[i],
                lin=(lin_wp, lin_bp) if last else None,
                tile_m=tile_m, tile_k=tile_k,
                out_dtype=jnp.float32 if last else compute_dtype)
            if last:
                out_p = res
            else:
                h = res

    return out_p[:n, :n_classes]


# Pure-JAX f32 reference (same math as the PyTorch module / PyG GCNConv).
def gcn_forward_ref(params, x, edge_index, num_nodes):
    adj = normalized_adjacency(edge_index, num_nodes)
    h = x.astype(jnp.float32)
    for w, b in zip(params["conv_w"], params["conv_b"]):
        h = jnp.maximum(adj @ (h @ w) + b, 0.0)
    return h @ params["lin_w"] + params["lin_b"]


# ---------------------------------------------------------------------------
# Demo
# ---------------------------------------------------------------------------
if __name__ == "__main__":
    key = jax.random.PRNGKey(0)

    # --- small graph: fused single-block path --------------------------------
    n1, c1, hid1, cls1, e1 = 60, 16, [64, 32], 7, 240
    k_x, k_e, k_p, key = jax.random.split(key, 4)
    x1 = jax.random.normal(k_x, (n1, c1), jnp.float32)
    ei1 = jax.random.randint(k_e, (2, e1), 0, n1, jnp.int32)
    p1 = init_gcn_params(k_p, c1, cls1, hid1)
    out1 = jax.block_until_ready(gcn_forward(p1, x1, ei1, n1))
    ref1 = gcn_forward_ref(p1, x1, ei1, n1)
    assert out1.shape == (n1, cls1), out1.shape
    err1 = float(jnp.max(jnp.abs(out1 - ref1)))
    assert err1 <= 0.05 * (float(jnp.max(jnp.abs(ref1))) + 1.0), err1

    # --- larger graph: row x K tiled aggregation path -------------------------
    n2, c2, hid2, cls2, e2 = 700, 48, [96, 64], 10, 3000
    k_x, k_e, k_p, key = jax.random.split(key, 4)
    x2 = jax.random.normal(k_x, (n2, c2), jnp.float32)
    ei2 = jax.random.randint(k_e, (2, e2), 0, n2, jnp.int32)
    p2 = init_gcn_params(k_p, c2, cls2, hid2)
    out2 = jax.block_until_ready(gcn_forward(p2, x2, ei2, n2))
    ref2 = gcn_forward_ref(p2, x2, ei2, n2)
    assert out2.shape == (n2, cls2), out2.shape
    err2 = float(jnp.max(jnp.abs(out2 - ref2)))
    assert err2 <= 0.05 * (float(jnp.max(jnp.abs(ref2))) + 1.0), err2

    assert bool(jnp.all(jnp.isfinite(out1))) and bool(jnp.all(jnp.isfinite(out2)))
    print("KERNEL_OK")
</pallas_src>

<mosaic_0001>
module attributes {stable_mosaic.version = 11 : i64} {
  func.func @fused_gcn_kernel(%arg0: memref<128x128xbf16, #tpu.memory_space<vmem>>, %arg1: memref<128x128xbf16, #tpu.memory_space<vmem>>, %arg2: memref<128x128xbf16, #tpu.memory_space<vmem>>, %arg3: memref<1x128xf32, #tpu.memory_space<vmem>>, %arg4: memref<128x128xbf16, #tpu.memory_space<vmem>>, %arg5: memref<1x128xf32, #tpu.memory_space<vmem>>, %arg6: memref<128x128xbf16, #tpu.memory_space<vmem>>, %arg7: memref<1x128xf32, #tpu.memory_space<vmem>>, %arg8: memref<128x128xf32, #tpu.memory_space<vmem>>) attributes {dimension_semantics = [], scalar_prefetch = 0 : i64, scratch_operands = 0 : i64, tpu.core_type = #tpu.core_type<tc>} {
    %c0 = arith.constant 0 : index
    %c0_0 = arith.constant 0 : index
    %0 = vector.load %arg0[%c0, %c0_0] : memref<128x128xbf16, #tpu.memory_space<vmem>>, vector<128x128xbf16>
    %c0_1 = arith.constant 0 : index
    %c0_2 = arith.constant 0 : index
    %1 = vector.load %arg1[%c0_1, %c0_2] : memref<128x128xbf16, #tpu.memory_space<vmem>>, vector<128x128xbf16>
    %c0_3 = arith.constant 0 : index
    %c0_4 = arith.constant 0 : index
    %2 = vector.load %arg2[%c0_3, %c0_4] : memref<128x128xbf16, #tpu.memory_space<vmem>>, vector<128x128xbf16>
    %c0_5 = arith.constant 0 : index
    %c0_6 = arith.constant 0 : index
    %3 = vector.load %arg3[%c0_5, %c0_6] : memref<1x128xf32, #tpu.memory_space<vmem>>, vector<1x128xf32>
    %cst = arith.constant dense<0.000000e+00> : vector<128x128xf32>
    %4 = tpu.matmul %1, %2, %cst {dimension_numbers = #tpu.dot_dimension_numbers<[1], [0], [0], [1], [0, 0, 1, 1], [], []>} : vector<128x128xbf16>, vector<128x128xbf16>, vector<128x128xf32> -> vector<128x128xf32>
    %5 = arith.truncf %4 : vector<128x128xf32> to vector<128x128xbf16>
    %cst_7 = arith.constant dense<0.000000e+00> : vector<128x128xf32>
    %6 = tpu.matmul %0, %5, %cst_7 {dimension_numbers = #tpu.dot_dimension_numbers<[1], [0], [0], [1], [0, 0, 1, 1], [], []>} : vector<128x128xbf16>, vector<128x128xbf16>, vector<128x128xf32> -> vector<128x128xf32>
    %7 = vector.broadcast %3 : vector<1x128xf32> to vector<128x128xf32>
    %8 = arith.addf %6, %7 : vector<128x128xf32>
    %cst_8 = arith.constant 0.000000e+00 : f32
    %9 = vector.broadcast %cst_8 : f32 to vector<128x128xf32>
    %10 = arith.maximumf %8, %9 : vector<128x128xf32>
    %11 = arith.truncf %10 : vector<128x128xf32> to vector<128x128xbf16>
    %c0_9 = arith.constant 0 : index
    %c0_10 = arith.constant 0 : index
    %12 = vector.load %arg4[%c0_9, %c0_10] : memref<128x128xbf16, #tpu.memory_space<vmem>>, vector<128x128xbf16>
    %c0_11 = arith.constant 0 : index
    %c0_12 = arith.constant 0 : index
    %13 = vector.load %arg5[%c0_11, %c0_12] : memref<1x128xf32, #tpu.memory_space<vmem>>, vector<1x128xf32>
    %cst_13 = arith.constant dense<0.000000e+00> : vector<128x128xf32>
    %14 = tpu.matmul %11, %12, %cst_13 {dimension_numbers = #tpu.dot_dimension_numbers<[1], [0], [0], [1], [0, 0, 1, 1], [], []>} : vector<128x128xbf16>, vector<128x128xbf16>, vector<128x128xf32> -> vector<128x128xf32>
    %15 = arith.truncf %14 : vector<128x128xf32> to vector<128x128xbf16>
    %cst_14 = arith.constant dense<0.000000e+00> : vector<128x128xf32>
    %16 = tpu.matmul %0, %15, %cst_14 {dimension_numbers = #tpu.dot_dimension_numbers<[1], [0], [0], [1], [0, 0, 1, 1], [], []>} : vector<128x128xbf16>, vector<128x128xbf16>, vector<128x128xf32> -> vector<128x128xf32>
    %17 = vector.broadcast %13 : vector<1x128xf32> to vector<128x128xf32>
    %18 = arith.addf %16, %17 : vector<128x128xf32>
    %cst_15 = arith.constant 0.000000e+00 : f32
    %19 = vector.broadcast %cst_15 : f32 to vector<128x128xf32>
    %20 = arith.maximumf %18, %19 : vector<128x128xf32>
    %21 = arith.truncf %20 : vector<128x128xf32> to vector<128x128xbf16>
    %c0_16 = arith.constant 0 : index
    %c0_17 = arith.constant 0 : index
    %22 = vector.load %arg6[%c0_16, %c0_17] : memref<128x128xbf16, #tpu.memory_space<vmem>>, vector<128x128xbf16>
    %c0_18 = arith.constant 0 : index
    %c0_19 = arith.constant 0 : index
    %23 = vector.load %arg7[%c0_18, %c0_19] : memref<1x128xf32, #tpu.memory_space<vmem>>, vector<1x128xf32>
    %cst_20 = arith.constant dense<0.000000e+00> : vector<128x128xf32>
    %24 = tpu.matmul %21, %22, %cst_20 {dimension_numbers = #tpu.dot_dimension_numbers<[1], [0], [0], [1], [0, 0, 1, 1], [], []>} : vector<128x128xbf16>, vector<128x128xbf16>, vector<128x128xf32> -> vector<128x128xf32>
    %25 = vector.broadcast %23 : vector<1x128xf32> to vector<128x128xf32>
    %26 = arith.addf %24, %25 : vector<128x128xf32>
    %c0_21 = arith.constant 0 : index
    %c0_22 = arith.constant 0 : index
    %27 = vector.load %arg8[%c0_21, %c0_22] : memref<128x128xf32, #tpu.memory_space<vmem>>, vector<128x128xf32>
    tpu.vector_store %arg8[%c0_21, %c0_22], %26 {strides = array<i32>} : memref<128x128xf32, #tpu.memory_space<vmem>>, vector<128x128xf32>,
    return
  }
}

</mosaic_0001>

<llo_original>
// kernel: tpu_custom_call.1
$region0: #{tpu_custom_call.1}
  #allocation0 [shape = 'u32[]', space=smem, size = 0x4, offset = 0x4, fixed_abs, tag = 'smem constant byte address 0x4 - core index']
  #allocation1 [shape = 'u32[144,128]{1,0:T(1,128)}', space=vmem, size = 0x12000, scoped, tag = 'internal scratch']
  %s0 = inlined_call_operand.hbm [shape: bf16[128,128], index: 0, kind: input, shape index: {}]
  %s1 = inlined_call_operand.hbm [shape: bf16[128,128], index: 1, kind: input, shape index: {}]
  %s2 = inlined_call_operand.hbm [shape: bf16[128,128], index: 2, kind: input, shape index: {}]
  %s3 = inlined_call_operand.vmem [shape: f32[1,128], index: 3, kind: input, shape index: {}]
  %s4 = inlined_call_operand.hbm [shape: bf16[128,128], index: 4, kind: input, shape index: {}]
  %s5 = inlined_call_operand.vmem [shape: f32[1,128], index: 5, kind: input, shape index: {}]
  %s6 = inlined_call_operand.hbm [shape: bf16[128,128], index: 6, kind: input, shape index: {}]
  %s7 = inlined_call_operand.vmem [shape: f32[1,128], index: 7, kind: input, shape index: {}]
  %s8 = inlined_call_operand.hbm [shape: f32[128,128], index: 8, kind: output, shape index: {}]
  %s9 = sld [smem:[#allocation0]]
  $region62: #{tpu_custom_call.1} parent=0
    _
  %s11 = ssub.s32 1, %s9
  %s12 = scalar_select 0, %s11, %s9
  $region1: #{tpu_custom_call.1} parent=0
    #allocation2 [shape = 'u8[32768]{0}', space=vmem, size = 0x8000, scoped, tag = 'input window, operand 0, single buffered']
    #allocation3 [shape = 's32[1]{0}', space=sflag, size = 0x4, scoped, tag = 'scoped memory for tpu_custom_call.1']
    #allocation4 [shape = 's32[1]{0}', space=sflag, size = 0x4, scoped, tag = 'scoped memory for tpu_custom_call.1']
    #allocation5 [shape = 'u8[32768]{0}', space=vmem, size = 0x8000, scoped, tag = 'input window, operand 1, single buffered']
    #allocation6 [shape = 's32[1]{0}', space=sflag, size = 0x4, scoped, tag = 'scoped memory for tpu_custom_call.1']
    #allocation7 [shape = 'u8[32768]{0}', space=vmem, size = 0x8000, scoped, tag = 'input window, operand 2, single buffered']
    #allocation8 [shape = 'u8[32768]{0}', space=vmem, size = 0x8000, scoped, tag = 'input window, operand 4, single buffered']
    #allocation9 [shape = 's32[1]{0}', space=sflag, size = 0x4, scoped, tag = 'scoped memory for tpu_custom_call.1']
    #allocation10 [shape = 'u8[32768]{0}', space=vmem, size = 0x8000, scoped, tag = 'input window, operand 6, single buffered']
    #allocation11 [shape = 'u8[65536]{0}', space=vmem, size = 0x10000, scoped, tag = 'output window, operand 0, single buffered']
    %13 = vsyncpa [#allocation3], 0
    %14 = vsyncpa [#allocation6], 0
    %15 = vsyncpa [#allocation9], 0
    %16 = vsyncpa [#allocation4], 0
    // Predicated region
    $region2: #{tpu_custom_call.1} parent=1 // pred_check
      _
    $region3: #{tpu_custom_call.1} parent=1 // pred_check_branch
      %18 = sbr.rel (0) target = $region5
    $region4: #{tpu_custom_call.1} parent=1 // pred_region
      %s20 = ssub.s32 1024, 1024
      %21 = vsyncadd [#allocation3], %s20
      %s22 = sshll.u32 [#allocation2], 4
      %s23 = int_to_ptr.vmem [resolvable:$true] %s22
      %28 = dma.hbm_to_vmem [thread:$0]  %s0, 1024, %s23, [#allocation3], 64, 64, 4
    $region5: #{tpu_custom_call.1} parent=1 // pred_fallthru
      _
    // Predicated region
    $region6: #{tpu_custom_call.1} parent=1 // pred_check
      _
    $region7: #{tpu_custom_call.1} parent=1 // pred_check_branch
      %30 = sbr.rel (0) target = $region9
    $region8: #{tpu_custom_call.1} parent=1 // pred_region
      %s32 = ssub.s32 1024, 1024
      %33 = vsyncadd [#allocation6], %s32
      %s34 = sshll.u32 [#allocation5], 4
      %s35 = int_to_ptr.vmem [resolvable:$true] %s34
      %40 = dma.hbm_to_vmem [thread:$0]  %s1, 1024, %s35, [#allocation6], 64, 64, 4
    $region9: #{tpu_custom_call.1} parent=1 // pred_fallthru
      _
    // Predicated region
    $region10: #{tpu_custom_call.1} parent=1 // pred_check
      _
    $region11: #{tpu_custom_call.1} parent=1 // pred_check_branch
      %42 = sbr.rel (0) target = $region13
    $region12: #{tpu_custom_call.1} parent=1 // pred_region
      %s44 = ssub.s32 1024, 1024
      %45 = vsyncadd [#allocation6], %s44
      %s46 = sshll.u32 [#allocation7], 4
      %s47 = int_to_ptr.vmem [resolvable:$true] %s46
      %52 = dma.hbm_to_vmem [thread:$0]  %s2, 1024, %s47, [#allocation6], 64, 64, 4
    $region13: #{tpu_custom_call.1} parent=1 // pred_fallthru
      _
    // Predicated region
    $region14: #{tpu_custom_call.1} parent=1 // pred_check
      _
    $region15: #{tpu_custom_call.1} parent=1 // pred_check_branch
      %54 = sbr.rel (0) target = $region17
    $region16: #{tpu_custom_call.1} parent=1 // pred_region
      _
    $region17: #{tpu_custom_call.1} parent=1 // pred_fallthru
      _
    // Predicated region
    $region18: #{tpu_custom_call.1} parent=1 // pred_check
      _
    $region19: #{tpu_custom_call.1} parent=1 // pred_check_branch
      %56 = sbr.rel (0) target = $region21
    $region20: #{tpu_custom_call.1} parent=1 // pred_region
      %s58 = ssub.s32 1024, 1024
      %59 = vsyncadd [#allocation9], %s58
      %s60 = sshll.u32 [#allocation8], 4
      %s61 = int_to_ptr.vmem [resolvable:$true] %s60
      %66 = dma.hbm_to_vmem [thread:$0]  %s4, 1024, %s61, [#allocation9], 64, 64, 4
    $region21: #{tpu_custom_call.1} parent=1 // pred_fallthru
      _
    // Predicated region
    $region22: #{tpu_custom_call.1} parent=1 // pred_check
      _
    $region23: #{tpu_custom_call.1} parent=1 // pred_check_branch
      %68 = sbr.rel (0) target = $region25
    $region24: #{tpu_custom_call.1} parent=1 // pred_region
      _
    $region25: #{tpu_custom_call.1} parent=1 // pred_fallthru
      _
    // Predicated region
    $region26: #{tpu_custom_call.1} parent=1 // pred_check
      _
    $region27: #{tpu_custom_call.1} parent=1 // pred_check_branch
      %70 = sbr.rel (0) target = $region29
    $region28: #{tpu_custom_call.1} parent=1 // pred_region
      %s72 = ssub.s32 1024, 1024
      %73 = vsyncadd [#allocation9], %s72
      %s74 = sshll.u32 [#allocation10], 4
      %s75 = int_to_ptr.vmem [resolvable:$true] %s74
      %80 = dma.hbm_to_vmem [thread:$0]  %s6, 1024, %s75, [#allocation9], 64, 64, 4
    $region29: #{tpu_custom_call.1} parent=1 // pred_fallthru
      _
    // Predicated region
    $region30: #{tpu_custom_call.1} parent=1 // pred_check
      _
    $region31: #{tpu_custom_call.1} parent=1 // pred_check_branch
      %82 = sbr.rel (0) target = $region33
    $region32: #{tpu_custom_call.1} parent=1 // pred_region
      _
    $region33: #{tpu_custom_call.1} parent=1 // pred_fallthru
      _
    // Predicated region
    $region34: #{tpu_custom_call.1} parent=1 // pred_check
      _
    $region35: #{tpu_custom_call.1} parent=1 // pred_check_branch
      %84 = sbr.rel (0) target = $region37
    $region36: #{tpu_custom_call.1} parent=1 // pred_region
      %85 = dma.done [#allocation3], 1024
    $region37: #{tpu_custom_call.1} parent=1 // pred_fallthru
      _
    // Predicated region
    $region38: #{tpu_custom_call.1} parent=1 // pred_check
      _
    $region39: #{tpu_custom_call.1} parent=1 // pred_check_branch
      %87 = sbr.rel (0) target = $region41
    $region40: #{tpu_custom_call.1} parent=1 // pred_region
      %88 = dma.done [#allocation6], 1024
    $region41: #{tpu_custom_call.1} parent=1 // pred_fallthru
      _
    // Predicated region
    $region42: #{tpu_custom_call.1} parent=1 // pred_check
      _
    $region43: #{tpu_custom_call.1} parent=1 // pred_check_branch
      %90 = sbr.rel (0) target = $region45
    $region44: #{tpu_custom_call.1} parent=1 // pred_region
      %91 = dma.done [#allocation6], 1024
    $region45: #{tpu_custom_call.1} parent=1 // pred_fallthru
      _
    // Predicated region
    $region46: #{tpu_custom_call.1} parent=1 // pred_check
      _
    $region47: #{tpu_custom_call.1} parent=1 // pred_check_branch
      %93 = sbr.rel (0) target = $region49
    $region48: #{tpu_custom_call.1} parent=1 // pred_region
      %94 = dma.done [#allocation9], 1024
    $region49: #{tpu_custom_call.1} parent=1 // pred_fallthru
      _
    // Predicated region
    $region50: #{tpu_custom_call.1} parent=1 // pred_check
      _
    $region51: #{tpu_custom_call.1} parent=1 // pred_check_branch
      %96 = sbr.rel (0) target = $region53
    $region52: #{tpu_custom_call.1} parent=1 // pred_region
      %97 = dma.done [#allocation9], 1024
    $region53: #{tpu_custom_call.1} parent=1 // pred_fallthru
      _
    %v99 = vld [vmem:[#allocation2] sm:$0xf]
    %v100 = vld [vmem:[#allocation2 + $0x4] sm:$0xf]
    %v101 = vld [vmem:[#allocation2 + $0x8] sm:$0xf]
    %v102 = vld [vmem:[#allocation2 + $0xc] sm:$0xf]
    %v103 = vld [vmem:[#allocation2 + $0x10] sm:$0xf]
    %v104 = vld [vmem:[#allocation2 + $0x14] sm:$0xf]
    %v105 = vld [vmem:[#allocation2 + $0x18] sm:$0xf]
    %v106 = vld [vmem:[#allocation2 + $0x1c] sm:$0xf]
    %v107 = vld [vmem:[#allocation2 + $0x20] sm:$0xf]
    %v108 = vld [vmem:[#allocation2 + $0x24] sm:$0xf]
    %v109 = vld [vmem:[#allocation2 + $0x28] sm:$0xf]
    %v110 = vld [vmem:[#allocation2 + $0x2c] sm:$0xf]
    %v111 = vld [vmem:[#allocation2 + $0x30] sm:$0xf]
    %v112 = vld [vmem:[#allocation2 + $0x34] sm:$0xf]
    %v113 = vld [vmem:[#allocation2 + $0x38] sm:$0xf]
    %v114 = vld [vmem:[#allocation2 + $0x3c] sm:$0xf]
    %v115 = vld [vmem:[#allocation5] sm:$0xf]
    %v116 = vld [vmem:[#allocation5 + $0x4] sm:$0xf]
    %v117 = vld [vmem:[#allocation5 + $0x8] sm:$0xf]
    %v118 = vld [vmem:[#allocation5 + $0xc] sm:$0xf]
    %v119 = vld [vmem:[#allocation5 + $0x10] sm:$0xf]
    %v120 = vld [vmem:[#allocation5 + $0x14] sm:$0xf]
    %v121 = vld [vmem:[#allocation5 + $0x18] sm:$0xf]
    %v122 = vld [vmem:[#allocation5 + $0x1c] sm:$0xf]
    %v123 = vld [vmem:[#allocation5 + $0x20] sm:$0xf]
    %v124 = vld [vmem:[#allocation5 + $0x24] sm:$0xf]
    %v125 = vld [vmem:[#allocation5 + $0x28] sm:$0xf]
    %v126 = vld [vmem:[#allocation5 + $0x2c] sm:$0xf]
    %v127 = vld [vmem:[#allocation5 + $0x30] sm:$0xf]
    %v128 = vld [vmem:[#allocation5 + $0x34] sm:$0xf]
    %v129 = vld [vmem:[#allocation5 + $0x38] sm:$0xf]
    %v130 = vld [vmem:[#allocation5 + $0x3c] sm:$0xf]
    %v131 = vld [vmem:[#allocation7] sm:$0xf]
    %v132 = vld [vmem:[#allocation7 + $0x4] sm:$0xf]
    %v133 = vld [vmem:[#allocation7 + $0x8] sm:$0xf]
    %v134 = vld [vmem:[#allocation7 + $0xc] sm:$0xf]
    %v135 = vld [vmem:[#allocation7 + $0x10] sm:$0xf]
    %v136 = vld [vmem:[#allocation7 + $0x14] sm:$0xf]
    %v137 = vld [vmem:[#allocation7 + $0x18] sm:$0xf]
    %v138 = vld [vmem:[#allocation7 + $0x1c] sm:$0xf]
    %v139 = vld [vmem:[#allocation7 + $0x20] sm:$0xf]
    %v140 = vld [vmem:[#allocation7 + $0x24] sm:$0xf]
    %v141 = vld [vmem:[#allocation7 + $0x28] sm:$0xf]
    %v142 = vld [vmem:[#allocation7 + $0x2c] sm:$0xf]
    %v143 = vld [vmem:[#allocation7 + $0x30] sm:$0xf]
    %v144 = vld [vmem:[#allocation7 + $0x34] sm:$0xf]
    %v145 = vld [vmem:[#allocation7 + $0x38] sm:$0xf]
    %v146 = vld [vmem:[#allocation7 + $0x3c] sm:$0xf]
    %v147 = vld [vmem:[%s3] sm:$0x1]
    %v164 = vunpack.c.l.b16 %v115
    %v165 = vunpack.c.l.b16 %v116
    %v166 = vunpack.c.l.b16 %v117
    %v167 = vunpack.c.l.b16 %v118
    %v168 = vunpack.c.l.b16 %v119
    %v169 = vunpack.c.l.b16 %v120
    %v170 = vunpack.c.l.b16 %v121
    %v171 = vunpack.c.l.b16 %v122
    %v172 = vunpack.c.l.b16 %v123
    %v173 = vunpack.c.l.b16 %v124
    %v174 = vunpack.c.l.b16 %v125
    %v175 = vunpack.c.l.b16 %v126
    %v176 = vunpack.c.l.b16 %v127
    %v177 = vunpack.c.l.b16 %v128
    %v178 = vunpack.c.l.b16 %v129
    %v179 = vunpack.c.l.b16 %v130
    %v180 = vpack.c.b16 %v165, %v164
    %v181 = vpack.c.b16 %v167, %v166
    %v182 = vpack.c.b16 %v169, %v168
    %v183 = vpack.c.b16 %v171, %v170
    %v184 = vpack.c.b16 %v173, %v172
    %v185 = vpack.c.b16 %v175, %v174
    %v186 = vpack.c.b16 %v177, %v176
    %v187 = vpack.c.b16 %v179, %v178
    %v212 = vunpack.c.l.b16 %v131
    %v213 = vunpack.c.l.b16 %v132
    %v214 = vunpack.c.l.b16 %v133
    %v215 = vunpack.c.l.b16 %v134
    %v216 = vunpack.c.l.b16 %v135
    %v217 = vunpack.c.l.b16 %v136
    %v218 = vunpack.c.l.b16 %v137
    %v219 = vunpack.c.l.b16 %v138
    %v220 = vunpack.c.l.b16 %v139
    %v221 = vunpack.c.l.b16 %v140
    %v222 = vunpack.c.l.b16 %v141
    %v223 = vunpack.c.l.b16 %v142
    %v224 = vunpack.c.l.b16 %v143
    %v225 = vunpack.c.l.b16 %v144
    %v226 = vunpack.c.l.b16 %v145
    %v227 = vunpack.c.l.b16 %v146
    %v228 = vpack.c.b16 %v213, %v212
    %v229 = vpack.c.b16 %v215, %v214
    %v230 = vpack.c.b16 %v217, %v216
    %v231 = vpack.c.b16 %v219, %v218
    %v232 = vpack.c.b16 %v221, %v220
    %v233 = vpack.c.b16 %v223, %v222
    %v234 = vpack.c.b16 %v225, %v224
    %v235 = vpack.c.b16 %v227, %v226
    %244 = vmatprep.subr.bf16.mxu0 0
    %245 = vmatpush1.bf16.msra.mxu0 %v235
    %246 = vmatprep.subr.bf16.mxu0 0
    %247 = vmatpush1.bf16.msra.mxu0 %v234
    %248 = vmatprep.subr.bf16.mxu0 0
    %249 = vmatpush1.bf16.msra.mxu0 %v233
    %250 = vmatprep.subr.bf16.mxu0 0
    %251 = vmatpush1.bf16.msra.mxu0 %v232
    %252 = vmatprep.subr.bf16.mxu0 0
    %253 = vmatpush1.bf16.msra.mxu0 %v231
    %254 = vmatprep.subr.bf16.mxu0 0
    %255 = vmatpush1.bf16.msra.mxu0 %v230
    %256 = vmatprep.subr.bf16.mxu0 0
    %257 = vmatpush1.bf16.msra.mxu0 %v229
    %258 = vmatprep.subr.bf16.mxu0 0
    %259 = vmatpush1.bf16.msra.mxu0 %v228
    %260 = vmatprep.subr.bf16.mxu0 0
    %261 = vmatpush2.bf16.msra.mxu0 0
    %262 = vmatprep.subr.bf16.mxu0 0
    %263 = vmatpush2.bf16.msra.mxu0 0
    %264 = vmatprep.subr.bf16.mxu0 0
    %265 = vmatpush2.bf16.msra.mxu0 0
    %266 = vmatprep.subr.bf16.mxu0 0
    %267 = vmatpush2.bf16.msra.mxu0 0
    %268 = vmatprep.subr.bf16.mxu0 0
    %269 = vmatpush2.bf16.msra.mxu0 0
    %270 = vmatprep.subr.bf16.mxu0 0
    %271 = vmatpush2.bf16.msra.mxu0 0
    %272 = vmatprep.subr.bf16.mxu0 0
    %273 = vmatpush2.bf16.msra.mxu0 0
    %274 = vmatprep.subr.bf16.mxu0 0
    %275 = vmatpush2.bf16.msra.mxu0 0
    %276 = vmatprep.mubr.bf16.mxu0 0
    %277 = vmatmul.mubr.bf16.gmra.mxu0 %v180
    %v278 = vpop.f32.mrf.mxu0
    %v279 = vadd.f32 0.0, %v278
    %v280 = vpop.f32.mrf.mxu0
    %v281 = vpop.f32.mrf.mxu0
    %v282 = vadd.f32 0.0, %v281
    %v283 = vpop.f32.mrf.mxu0
    %284 = vmatprep.mubr.bf16.mxu0 0
    %285 = vmatmul.mubr.bf16.gmra.mxu0 %v181
    %v286 = vpop.f32.mrf.mxu0
    %v287 = vadd.f32 0.0, %v286
    %v288 = vpop.f32.mrf.mxu0
    %v289 = vpop.f32.mrf.mxu0
    %v290 = vadd.f32 0.0, %v289
    %v291 = vpop.f32.mrf.mxu0
    %292 = vmatprep.mubr.bf16.mxu0 0
    %293 = vmatmul.mubr.bf16.gmra.mxu0 %v182
    %v294 = vpop.f32.mrf.mxu0
    %v295 = vadd.f32 0.0, %v294
    %v296 = vpop.f32.mrf.mxu0
    %v297 = vpop.f32.mrf.mxu0
    %v298 = vadd.f32 0.0, %v297
    %v299 = vpop.f32.mrf.mxu0
    %300 = vmatprep.mubr.bf16.mxu0 0
    %301 = vmatmul.mubr.bf16.gmra.mxu0 %v183
    %v302 = vpop.f32.mrf.mxu0
    %v303 = vadd.f32 0.0, %v302
    %v304 = vpop.f32.mrf.mxu0
    %v305 = vpop.f32.mrf.mxu0
    %v306 = vadd.f32 0.0, %v305
    %v307 = vpop.f32.mrf.mxu0
    %308 = vmatprep.mubr.bf16.mxu0 0
    %309 = vmatmul.mubr.bf16.gmra.mxu0 %v184
    %v310 = vpop.f32.mrf.mxu0
    %v311 = vadd.f32 0.0, %v310
    %v312 = vpop.f32.mrf.mxu0
    %v313 = vpop.f32.mrf.mxu0
    %v314 = vadd.f32 0.0, %v313
    %v315 = vpop.f32.mrf.mxu0
    %316 = vmatprep.mubr.bf16.mxu0 0
    %317 = vmatmul.mubr.bf16.gmra.mxu0 %v185
    %v318 = vpop.f32.mrf.mxu0
    %v319 = vadd.f32 0.0, %v318
    %v320 = vpop.f32.mrf.mxu0
    %v321 = vpop.f32.mrf.mxu0
    %v322 = vadd.f32 0.0, %v321
    %v323 = vpop.f32.mrf.mxu0
    %324 = vmatprep.mubr.bf16.mxu0 0
    %325 = vmatmul.mubr.bf16.gmra.mxu0 %v186
    %v326 = vpop.f32.mrf.mxu0
    %v327 = vadd.f32 0.0, %v326
    %v328 = vpop.f32.mrf.mxu0
    %v329 = vpop.f32.mrf.mxu0
    %v330 = vadd.f32 0.0, %v329
    %v331 = vpop.f32.mrf.mxu0
    %332 = vmatprep.mubr.bf16.mxu0 0
    %333 = vmatmul.mubr.bf16.gmra.mxu0 %v187
    %v334 = vpop.f32.mrf.mxu0
    %v335 = vadd.f32 0.0, %v334
    %v336 = vpop.f32.mrf.mxu0
    %v337 = vpop.f32.mrf.mxu0
    %v338 = vadd.f32 0.0, %v337
    %v339 = vpop.f32.mrf.mxu0
    %340 = vdwg.mxu0
    %v341 = vpack.c.bf16 %v282, %v279
    %v342 = vpack.c.bf16 %v290, %v287
    %v343 = vpack.c.bf16 %v298, %v295
    %v344 = vpack.c.bf16 %v306, %v303
    %v345 = vpack.c.bf16 %v314, %v311
    %v346 = vpack.c.bf16 %v322, %v319
    %v347 = vpack.c.bf16 %v330, %v327
    %v348 = vpack.c.bf16 %v338, %v335
    %v350 = vlaneseq
    %v351 = vshrl.u32 %v350, 7
    %v352 = vsub.s32 0, %v351
    %v353 = vrot.slane %v147, %v352
    %v371 = vunpack.c.l.b16 %v99
    %v372 = vunpack.c.l.b16 %v100
    %v373 = vunpack.c.l.b16 %v101
    %v374 = vunpack.c.l.b16 %v102
    %v375 = vunpack.c.l.b16 %v103
    %v376 = vunpack.c.l.b16 %v104
    %v377 = vunpack.c.l.b16 %v105
    %v378 = vunpack.c.l.b16 %v106
    %v379 = vunpack.c.l.b16 %v107
    %v380 = vunpack.c.l.b16 %v108
    %v381 = vunpack.c.l.b16 %v109
    %v382 = vunpack.c.l.b16 %v110
    %v383 = vunpack.c.l.b16 %v111
    %v384 = vunpack.c.l.b16 %v112
    %v385 = vunpack.c.l.b16 %v113
    %v386 = vunpack.c.l.b16 %v114
    %v387 = vpack.c.b16 %v372, %v371
    %v388 = vpack.c.b16 %v374, %v373
    %v389 = vpack.c.b16 %v376, %v375
    %v390 = vpack.c.b16 %v378, %v377
    %v391 = vpack.c.b16 %v380, %v379
    %v392 = vpack.c.b16 %v382, %v381
    %v393 = vpack.c.b16 %v384, %v383
    %v394 = vpack.c.b16 %v386, %v385
    %403 = vmatprep.subr.bf16.mxu0 0
    %404 = vmatpush1.bf16.msra.mxu0 %v348
    %405 = vmatprep.subr.bf16.mxu0 0
    %406 = vmatpush1.bf16.msra.mxu0 %v347
    %407 = vmatprep.subr.bf16.mxu0 0
    %408 = vmatpush1.bf16.msra.mxu0 %v346
    %409 = vmatprep.subr.bf16.mxu0 0
    %410 = vmatpush1.bf16.msra.mxu0 %v345
    %411 = vmatprep.subr.bf16.mxu0 0
    %412 = vmatpush1.bf16.msra.mxu0 %v344
    %413 = vmatprep.subr.bf16.mxu0 0
    %414 = vmatpush1.bf16.msra.mxu0 %v343
    %415 = vmatprep.subr.bf16.mxu0 0
    %416 = vmatpush1.bf16.msra.mxu0 %v342
    %417 = vmatprep.subr.bf16.mxu0 0
    %418 = vmatpush1.bf16.msra.mxu0 %v341
    %419 = vmatprep.subr.bf16.mxu0 0
    %420 = vmatpush2.bf16.msra.mxu0 0
    %421 = vmatprep.subr.bf16.mxu0 0
    %422 = vmatpush2.bf16.msra.mxu0 0
    %423 = vmatprep.subr.bf16.mxu0 0
    %424 = vmatpush2.bf16.msra.mxu0 0
    %425 = vmatprep.subr.bf16.mxu0 0
    %426 = vmatpush2.bf16.msra.mxu0 0
    %427 = vmatprep.subr.bf16.mxu0 0
    %428 = vmatpush2.bf16.msra.mxu0 0
    %429 = vmatprep.subr.bf16.mxu0 0
    %430 = vmatpush2.bf16.msra.mxu0 0
    %431 = vmatprep.subr.bf16.mxu0 0
    %432 = vmatpush2.bf16.msra.mxu0 0
    %433 = vmatprep.subr.bf16.mxu0 0
    %434 = vmatpush2.bf16.msra.mxu0 0
    %435 = vmatprep.mubr.bf16.mxu0 0
    %436 = vmatmul.mubr.bf16.gmra.mxu0 %v387
    %v437 = vpop.f32.mrf.mxu0
    %v438 = vadd.f32 %v353, %v437
    %v439 = vpop.f32.mrf.mxu0
    %v440 = vpop.f32.mrf.mxu0
    %v441 = vadd.f32 %v353, %v440
    %v442 = vpop.f32.mrf.mxu0
    %443 = vmatprep.mubr.bf16.mxu0 0
    %444 = vmatmul.mubr.bf16.gmra.mxu0 %v388
    %v445 = vpop.f32.mrf.mxu0
    %v446 = vadd.f32 %v353, %v445
    %v447 = vpop.f32.mrf.mxu0
    %v448 = vpop.f32.mrf.mxu0
    %v449 = vadd.f32 %v353, %v448
    %v450 = vpop.f32.mrf.mxu0
    %451 = vmatprep.mubr.bf16.mxu0 0
    %452 = vmatmul.mubr.bf16.gmra.mxu0 %v389
    %v453 = vpop.f32.mrf.mxu0
    %v454 = vadd.f32 %v353, %v453
    %v455 = vpop.f32.mrf.mxu0
    %v456 = vpop.f32.mrf.mxu0
    %v457 = vadd.f32 %v353, %v456
    %v458 = vpop.f32.mrf.mxu0
    %459 = vmatprep.mubr.bf16.mxu0 0
    %460 = vmatmul.mubr.bf16.gmra.mxu0 %v390
    %v461 = vpop.f32.mrf.mxu0
    %v462 = vadd.f32 %v353, %v461
    %v463 = vpop.f32.mrf.mxu0
    %v464 = vpop.f32.mrf.mxu0
    %v465 = vadd.f32 %v353, %v464
    %v466 = vpop.f32.mrf.mxu0
    %467 = vmatprep.mubr.bf16.mxu0 0
    %468 = vmatmul.mubr.bf16.gmra.mxu0 %v391
    %v469 = vpop.f32.mrf.mxu0
    %v470 = vadd.f32 %v353, %v469
    %v471 = vpop.f32.mrf.mxu0
    %v472 = vpop.f32.mrf.mxu0
    %v473 = vadd.f32 %v353, %v472
    %v474 = vpop.f32.mrf.mxu0
    %475 = vmatprep.mubr.bf16.mxu0 0
    %476 = vmatmul.mubr.bf16.gmra.mxu0 %v392
    %v477 = vpop.f32.mrf.mxu0
    %v478 = vadd.f32 %v353, %v477
    %v479 = vpop.f32.mrf.mxu0
    %v480 = vpop.f32.mrf.mxu0
    %v481 = vadd.f32 %v353, %v480
    %v482 = vpop.f32.mrf.mxu0
    %483 = vmatprep.mubr.bf16.mxu0 0
    %484 = vmatmul.mubr.bf16.gmra.mxu0 %v393
    %v485 = vpop.f32.mrf.mxu0
    %v486 = vadd.f32 %v353, %v485
    %v487 = vpop.f32.mrf.mxu0
    %v488 = vpop.f32.mrf.mxu0
    %v489 = vadd.f32 %v353, %v488
    %v490 = vpop.f32.mrf.mxu0
    %491 = vmatprep.mubr.bf16.mxu0 0
    %492 = vmatmul.mubr.bf16.gmra.mxu0 %v394
    %v493 = vpop.f32.mrf.mxu0
    %v494 = vadd.f32 %v353, %v493
    %v495 = vpop.f32.mrf.mxu0
    %v496 = vpop.f32.mrf.mxu0
    %v497 = vadd.f32 %v353, %v496
    %v498 = vpop.f32.mrf.mxu0
    %499 = vdwg.mxu0
    %v500 = vmax.f32 %v438, 0.0
    %v501 = vmax.f32 %v441, 0.0
    %v502 = vmax.f32 %v446, 0.0
    %v503 = vmax.f32 %v449, 0.0
    %v504 = vmax.f32 %v454, 0.0
    %v505 = vmax.f32 %v457, 0.0
    %v506 = vmax.f32 %v462, 0.0
    %v507 = vmax.f32 %v465, 0.0
    %v508 = vmax.f32 %v470, 0.0
    %v509 = vmax.f32 %v473, 0.0
    %v510 = vmax.f32 %v478, 0.0
    %v511 = vmax.f32 %v481, 0.0
    %v512 = vmax.f32 %v486, 0.0
    %v513 = vmax.f32 %v489, 0.0
    %v514 = vmax.f32 %v494, 0.0
    %v515 = vmax.f32 %v497, 0.0
    %v516 = vpack.c.bf16 %v501, %v500
    %v517 = vpack.c.bf16 %v503, %v502
    %v518 = vpack.c.bf16 %v505, %v504
    %v519 = vpack.c.bf16 %v507, %v506
    %v520 = vpack.c.bf16 %v509, %v508
    %v521 = vpack.c.bf16 %v511, %v510
    %v522 = vpack.c.bf16 %v513, %v512
    %v523 = vpack.c.bf16 %v515, %v514
    %v524 = vld [vmem:[#allocation8] sm:$0xf]
    %v525 = vld [vmem:[#allocation8 + $0x4] sm:$0xf]
    %v526 = vld [vmem:[#allocation8 + $0x8] sm:$0xf]
    %v527 = vld [vmem:[#allocation8 + $0xc] sm:$0xf]
    %v528 = vld [vmem:[#allocation8 + $0x10] sm:$0xf]
    %v529 = vld [vmem:[#allocation8 + $0x14] sm:$0xf]
    %v530 = vld [vmem:[#allocation8 + $0x18] sm:$0xf]
    %v531 = vld [vmem:[#allocation8 + $0x1c] sm:$0xf]
    %v532 = vld [vmem:[#allocation8 + $0x20] sm:$0xf]
    %v533 = vld [vmem:[#allocation8 + $0x24] sm:$0xf]
    %v534 = vld [vmem:[#allocation8 + $0x28] sm:$0xf]
    %v535 = vld [vmem:[#allocation8 + $0x2c] sm:$0xf]
    %v536 = vld [vmem:[#allocation8 + $0x30] sm:$0xf]
    %v537 = vld [vmem:[#allocation8 + $0x34] sm:$0xf]
    %v538 = vld [vmem:[#allocation8 + $0x38] sm:$0xf]
    %v539 = vld [vmem:[#allocation8 + $0x3c] sm:$0xf]
    %v540 = vld [vmem:[%s5] sm:$0x1]
    %v557 = vunpack.c.l.b16 %v524
    %v558 = vunpack.c.l.b16 %v525
    %v559 = vunpack.c.l.b16 %v526
    %v560 = vunpack.c.l.b16 %v527
    %v561 = vunpack.c.l.b16 %v528
    %v562 = vunpack.c.l.b16 %v529
    %v563 = vunpack.c.l.b16 %v530
    %v564 = vunpack.c.l.b16 %v531
    %v565 = vunpack.c.l.b16 %v532
    %v566 = vunpack.c.l.b16 %v533
    %v567 = vunpack.c.l.b16 %v534
    %v568 = vunpack.c.l.b16 %v535
    %v569 = vunpack.c.l.b16 %v536
    %v570 = vunpack.c.l.b16 %v537
    %v571 = vunpack.c.l.b16 %v538
    %v572 = vunpack.c.l.b16 %v539
    %v573 = vpack.c.b16 %v558, %v557
    %v574 = vpack.c.b16 %v560, %v559
    %v575 = vpack.c.b16 %v562, %v561
    %v576 = vpack.c.b16 %v564, %v563
    %v577 = vpack.c.b16 %v566, %v565
    %v578 = vpack.c.b16 %v568, %v567
    %v579 = vpack.c.b16 %v570, %v569
    %v580 = vpack.c.b16 %v572, %v571
    %589 = vmatprep.subr.bf16.mxu0 0
    %590 = vmatpush1.bf16.msra.mxu0 %v580
    %591 = vmatprep.subr.bf16.mxu0 0
    %592 = vmatpush1.bf16.msra.mxu0 %v579
    %593 = vmatprep.subr.bf16.mxu0 0
    %594 = vmatpush1.bf16.msra.mxu0 %v578
    %595 = vmatprep.subr.bf16.mxu0 0
    %596 = vmatpush1.bf16.msra.mxu0 %v577
    %597 = vmatprep.subr.bf16.mxu0 0
    %598 = vmatpush1.bf16.msra.mxu0 %v576
    %599 = vmatprep.subr.bf16.mxu0 0
    %600 = vmatpush1.bf16.msra.mxu0 %v575
    %601 = vmatprep.subr.bf16.mxu0 0
    %602 = vmatpush1.bf16.msra.mxu0 %v574
    %603 = vmatprep.subr.bf16.mxu0 0
    %604 = vmatpush1.bf16.msra.mxu0 %v573
    %605 = vmatprep.subr.bf16.mxu0 0
    %606 = vmatpush2.bf16.msra.mxu0 0
    %607 = vmatprep.subr.bf16.mxu0 0
    %608 = vmatpush2.bf16.msra.mxu0 0
    %609 = vmatprep.subr.bf16.mxu0 0
    %610 = vmatpush2.bf16.msra.mxu0 0
    %611 = vmatprep.subr.bf16.mxu0 0
    %612 = vmatpush2.bf16.msra.mxu0 0
    %613 = vmatprep.subr.bf16.mxu0 0
    %614 = vmatpush2.bf16.msra.mxu0 0
    %615 = vmatprep.subr.bf16.mxu0 0
    %616 = vmatpush2.bf16.msra.mxu0 0
    %617 = vmatprep.subr.bf16.mxu0 0
    %618 = vmatpush2.bf16.msra.mxu0 0
    %619 = vmatprep.subr.bf16.mxu0 0
    %620 = vmatpush2.bf16.msra.mxu0 0
    %621 = vmatprep.mubr.bf16.mxu0 0
    %622 = vmatmul.mubr.bf16.gmra.mxu0 %v516
    %v623 = vpop.f32.mrf.mxu0
    %v624 = vadd.f32 0.0, %v623
    %v625 = vpop.f32.mrf.mxu0
    %v626 = vpop.f32.mrf.mxu0
    %v627 = vadd.f32 0.0, %v626
    %v628 = vpop.f32.mrf.mxu0
    %629 = vmatprep.mubr.bf16.mxu0 0
    %630 = vmatmul.mubr.bf16.gmra.mxu0 %v517
    %v631 = vpop.f32.mrf.mxu0
    %v632 = vadd.f32 0.0, %v631
    %v633 = vpop.f32.mrf.mxu0
    %v634 = vpop.f32.mrf.mxu0
    %v635 = vadd.f32 0.0, %v634
    %v636 = vpop.f32.mrf.mxu0
    %637 = vmatprep.mubr.bf16.mxu0 0
    %638 = vmatmul.mubr.bf16.gmra.mxu0 %v518
    %v639 = vpop.f32.mrf.mxu0
    %v640 = vadd.f32 0.0, %v639
    %v641 = vpop.f32.mrf.mxu0
    %v642 = vpop.f32.mrf.mxu0
    %v643 = vadd.f32 0.0, %v642
    %v644 = vpop.f32.mrf.mxu0
    %645 = vmatprep.mubr.bf16.mxu0 0
    %646 = vmatmul.mubr.bf16.gmra.mxu0 %v519
    %v647 = vpop.f32.mrf.mxu0
    %v648 = vadd.f32 0.0, %v647
    %v649 = vpop.f32.mrf.mxu0
    %v650 = vpop.f32.mrf.mxu0
    %v651 = vadd.f32 0.0, %v650
    %v652 = vpop.f32.mrf.mxu0
    %653 = vmatprep.mubr.bf16.mxu0 0
    %654 = vmatmul.mubr.bf16.gmra.mxu0 %v520
    %v655 = vpop.f32.mrf.mxu0
    %v656 = vadd.f32 0.0, %v655
    %v657 = vpop.f32.mrf.mxu0
    %v658 = vpop.f32.mrf.mxu0
    %v659 = vadd.f32 0.0, %v658
    %v660 = vpop.f32.mrf.mxu0
    %661 = vmatprep.mubr.bf16.mxu0 0
    %662 = vmatmul.mubr.bf16.gmra.mxu0 %v521
    %v663 = vpop.f32.mrf.mxu0
    %v664 = vadd.f32 0.0, %v663
    %v665 = vpop.f32.mrf.mxu0
    %v666 = vpop.f32.mrf.mxu0
    %v667 = vadd.f32 0.0, %v666
    %v668 = vpop.f32.mrf.mxu0
    %669 = vmatprep.mubr.bf16.mxu0 0
    %670 = vmatmul.mubr.bf16.gmra.mxu0 %v522
    %v671 = vpop.f32.mrf.mxu0
    %v672 = vadd.f32 0.0, %v671
    %v673 = vpop.f32.mrf.mxu0
    %v674 = vpop.f32.mrf.mxu0
    %v675 = vadd.f32 0.0, %v674
    %v676 = vpop.f32.mrf.mxu0
    %677 = vmatprep.mubr.bf16.mxu0 0
    %678 = vmatmul.mubr.bf16.gmra.mxu0 %v523
    %v679 = vpop.f32.mrf.mxu0
    %v680 = vadd.f32 0.0, %v679
    %v681 = vpop.f32.mrf.mxu0
    %v682 = vpop.f32.mrf.mxu0
    %v683 = vadd.f32 0.0, %v682
    %v684 = vpop.f32.mrf.mxu0
    %685 = vdwg.mxu0
    %v686 = vpack.c.bf16 %v627, %v624
    %v687 = vpack.c.bf16 %v635, %v632
    %v688 = vpack.c.bf16 %v643, %v640
    %v689 = vpack.c.bf16 %v651, %v648
    %v690 = vpack.c.bf16 %v659, %v656
    %v691 = vpack.c.bf16 %v667, %v664
    %v692 = vpack.c.bf16 %v675, %v672
    %v693 = vpack.c.bf16 %v683, %v680
    %v695 = vlaneseq
    %v696 = vshrl.u32 %v695, 7
    %v697 = vsub.s32 0, %v696
    %v698 = vrot.slane %v540, %v697
    %700 = vmatprep.subr.bf16.mxu0 0
    %701 = vmatpush1.bf16.msra.mxu0 %v693
    %702 = vmatprep.subr.bf16.mxu0 0
    %703 = vmatpush1.bf16.msra.mxu0 %v692
    %704 = vmatprep.subr.bf16.mxu0 0
    %705 = vmatpush1.bf16.msra.mxu0 %v691
    %706 = vmatprep.subr.bf16.mxu0 0
    %707 = vmatpush1.bf16.msra.mxu0 %v690
    %708 = vmatprep.subr.bf16.mxu0 0
    %709 = vmatpush1.bf16.msra.mxu0 %v689
    %710 = vmatprep.subr.bf16.mxu0 0
    %711 = vmatpush1.bf16.msra.mxu0 %v688
    %712 = vmatprep.subr.bf16.mxu0 0
    %713 = vmatpush1.bf16.msra.mxu0 %v687
    %714 = vmatprep.subr.bf16.mxu0 0
    %715 = vmatpush1.bf16.msra.mxu0 %v686
    %716 = vmatprep.subr.bf16.mxu0 0
    %717 = vmatpush2.bf16.msra.mxu0 0
    %718 = vmatprep.subr.bf16.mxu0 0
    %719 = vmatpush2.bf16.msra.mxu0 0
    %720 = vmatprep.subr.bf16.mxu0 0
    %721 = vmatpush2.bf16.msra.mxu0 0
    %722 = vmatprep.subr.bf16.mxu0 0
    %723 = vmatpush2.bf16.msra.mxu0 0
    %724 = vmatprep.subr.bf16.mxu0 0
    %725 = vmatpush2.bf16.msra.mxu0 0
    %726 = vmatprep.subr.bf16.mxu0 0
    %727 = vmatpush2.bf16.msra.mxu0 0
    %728 = vmatprep.subr.bf16.mxu0 0
    %729 = vmatpush2.bf16.msra.mxu0 0
    %730 = vmatprep.subr.bf16.mxu0 0
    %731 = vmatpush2.bf16.msra.mxu0 0
    %732 = vmatprep.mubr.bf16.mxu0 0
    %733 = vmatmul.mubr.bf16.gmra.mxu0 %v387
    %v734 = vpop.f32.mrf.mxu0
    %v735 = vadd.f32 %v698, %v734
    %v736 = vpop.f32.mrf.mxu0
    %v737 = vpop.f32.mrf.mxu0
    %v738 = vadd.f32 %v698, %v737
    %v739 = vpop.f32.mrf.mxu0
    %740 = vmatprep.mubr.bf16.mxu0 0
    %741 = vmatmul.mubr.bf16.gmra.mxu0 %v388
    %v742 = vpop.f32.mrf.mxu0
    %v743 = vadd.f32 %v698, %v742
    %v744 = vpop.f32.mrf.mxu0
    %v745 = vpop.f32.mrf.mxu0
    %v746 = vadd.f32 %v698, %v745
    %v747 = vpop.f32.mrf.mxu0
    %748 = vmatprep.mubr.bf16.mxu0 0
    %749 = vmatmul.mubr.bf16.gmra.mxu0 %v389
    %v750 = vpop.f32.mrf.mxu0
    %v751 = vadd.f32 %v698, %v750
    %v752 = vpop.f32.mrf.mxu0
    %v753 = vpop.f32.mrf.mxu0
    %v754 = vadd.f32 %v698, %v753
    %v755 = vpop.f32.mrf.mxu0
    %756 = vmatprep.mubr.bf16.mxu0 0
    %757 = vmatmul.mubr.bf16.gmra.mxu0 %v390
    %v758 = vpop.f32.mrf.mxu0
    %v759 = vadd.f32 %v698, %v758
    %v760 = vpop.f32.mrf.mxu0
    %v761 = vpop.f32.mrf.mxu0
    %v762 = vadd.f32 %v698, %v761
    %v763 = vpop.f32.mrf.mxu0
    %764 = vmatprep.mubr.bf16.mxu0 0
    %765 = vmatmul.mubr.bf16.gmra.mxu0 %v391
    %v766 = vpop.f32.mrf.mxu0
    %v767 = vadd.f32 %v698, %v766
    %v768 = vpop.f32.mrf.mxu0
    %v769 = vpop.f32.mrf.mxu0
    %v770 = vadd.f32 %v698, %v769
    %v771 = vpop.f32.mrf.mxu0
    %772 = vmatprep.mubr.bf16.mxu0 0
    %773 = vmatmul.mubr.bf16.gmra.mxu0 %v392
    %v774 = vpop.f32.mrf.mxu0
    %v775 = vadd.f32 %v698, %v774
    %v776 = vpop.f32.mrf.mxu0
    %v777 = vpop.f32.mrf.mxu0
    %v778 = vadd.f32 %v698, %v777
    %v779 = vpop.f32.mrf.mxu0
    %780 = vmatprep.mubr.bf16.mxu0 0
    %781 = vmatmul.mubr.bf16.gmra.mxu0 %v393
    %v782 = vpop.f32.mrf.mxu0
    %v783 = vadd.f32 %v698, %v782
    %v784 = vpop.f32.mrf.mxu0
    %v785 = vpop.f32.mrf.mxu0
    %v786 = vadd.f32 %v698, %v785
    %v787 = vpop.f32.mrf.mxu0
    %788 = vmatprep.mubr.bf16.mxu0 0
    %789 = vmatmul.mubr.bf16.gmra.mxu0 %v394
    %v790 = vpop.f32.mrf.mxu0
    %v791 = vadd.f32 %v698, %v790
    %v792 = vpop.f32.mrf.mxu0
    %v793 = vpop.f32.mrf.mxu0
    %v794 = vadd.f32 %v698, %v793
    %v795 = vpop.f32.mrf.mxu0
    %796 = vdwg.mxu0
    %v797 = vmax.f32 %v735, 0.0
    %v798 = vmax.f32 %v738, 0.0
    %v799 = vmax.f32 %v743, 0.0
    %v800 = vmax.f32 %v746, 0.0
    %v801 = vmax.f32 %v751, 0.0
    %v802 = vmax.f32 %v754, 0.0
    %v803 = vmax.f32 %v759, 0.0
    %v804 = vmax.f32 %v762, 0.0
    %v805 = vmax.f32 %v767, 0.0
    %v806 = vmax.f32 %v770, 0.0
    %v807 = vmax.f32 %v775, 0.0
    %v808 = vmax.f32 %v778, 0.0
    %v809 = vmax.f32 %v783, 0.0
    %v810 = vmax.f32 %v786, 0.0
    %v811 = vmax.f32 %v791, 0.0
    %v812 = vmax.f32 %v794, 0.0
    %v813 = vpack.c.bf16 %v798, %v797
    %v814 = vpack.c.bf16 %v800, %v799
    %v815 = vpack.c.bf16 %v802, %v801
    %v816 = vpack.c.bf16 %v804, %v803
    %v817 = vpack.c.bf16 %v806, %v805
    %v818 = vpack.c.bf16 %v808, %v807
    %v819 = vpack.c.bf16 %v810, %v809
    %v820 = vpack.c.bf16 %v812, %v811
    %v821 = vld [vmem:[#allocation10] sm:$0xf]
    %v822 = vld [vmem:[#allocation10 + $0x4] sm:$0xf]
    %v823 = vld [vmem:[#allocation10 + $0x8] sm:$0xf]
    %v824 = vld [vmem:[#allocation10 + $0xc] sm:$0xf]
    %v825 = vld [vmem:[#allocation10 + $0x10] sm:$0xf]
    %v826 = vld [vmem:[#allocation10 + $0x14] sm:$0xf]
    %v827 = vld [vmem:[#allocation10 + $0x18] sm:$0xf]
    %v828 = vld [vmem:[#allocation10 + $0x1c] sm:$0xf]
    %v829 = vld [vmem:[#allocation10 + $0x20] sm:$0xf]
    %v830 = vld [vmem:[#allocation10 + $0x24] sm:$0xf]
    %v831 = vld [vmem:[#allocation10 + $0x28] sm:$0xf]
    %v832 = vld [vmem:[#allocation10 + $0x2c] sm:$0xf]
    %v833 = vld [vmem:[#allocation10 + $0x30] sm:$0xf]
    %v834 = vld [vmem:[#allocation10 + $0x34] sm:$0xf]
    %v835 = vld [vmem:[#allocation10 + $0x38] sm:$0xf]
    %v836 = vld [vmem:[#allocation10 + $0x3c] sm:$0xf]
    %v837 = vld [vmem:[%s7] sm:$0x1]
    %v839 = vlaneseq
    %v840 = vshrl.u32 %v839, 7
    %v841 = vsub.s32 0, %v840
    %v842 = vrot.slane %v837, %v841
    %v860 = vunpack.c.l.b16 %v821
    %v861 = vunpack.c.l.b16 %v822
    %v862 = vunpack.c.l.b16 %v823
    %v863 = vunpack.c.l.b16 %v824
    %v864 = vunpack.c.l.b16 %v825
    %v865 = vunpack.c.l.b16 %v826
    %v866 = vunpack.c.l.b16 %v827
    %v867 = vunpack.c.l.b16 %v828
    %v868 = vunpack.c.l.b16 %v829
    %v869 = vunpack.c.l.b16 %v830
    %v870 = vunpack.c.l.b16 %v831
    %v871 = vunpack.c.l.b16 %v832
    %v872 = vunpack.c.l.b16 %v833
    %v873 = vunpack.c.l.b16 %v834
    %v874 = vunpack.c.l.b16 %v835
    %v875 = vunpack.c.l.b16 %v836
    %v876 = vpack.c.b16 %v861, %v860
    %v877 = vpack.c.b16 %v863, %v862
    %v878 = vpack.c.b16 %v865, %v864
    %v879 = vpack.c.b16 %v867, %v866
    %v880 = vpack.c.b16 %v869, %v868
    %v881 = vpack.c.b16 %v871, %v870
    %v882 = vpack.c.b16 %v873, %v872
    %v883 = vpack.c.b16 %v875, %v874
    %892 = vmatprep.subr.bf16.mxu0 0
    %893 = vmatpush1.bf16.msra.mxu0 %v883
    %894 = vmatprep.subr.bf16.mxu0 0
    %895 = vmatpush1.bf16.msra.mxu0 %v882
    %896 = vmatprep.subr.bf16.mxu0 0
    %897 = vmatpush1.bf16.msra.mxu0 %v881
    %898 = vmatprep.subr.bf16.mxu0 0
    %899 = vmatpush1.bf16.msra.mxu0 %v880
    %900 = vmatprep.subr.bf16.mxu0 0
    %901 = vmatpush1.bf16.msra.mxu0 %v879
    %902 = vmatprep.subr.bf16.mxu0 0
    %903 = vmatpush1.bf16.msra.mxu0 %v878
    %904 = vmatprep.subr.bf16.mxu0 0
    %905 = vmatpush1.bf16.msra.mxu0 %v877
    %906 = vmatprep.subr.bf16.mxu0 0
    %907 = vmatpush1.bf16.msra.mxu0 %v876
    %908 = vmatprep.subr.bf16.mxu0 0
    %909 = vmatpush2.bf16.msra.mxu0 0
    %910 = vmatprep.subr.bf16.mxu0 0
    %911 = vmatpush2.bf16.msra.mxu0 0
    %912 = vmatprep.subr.bf16.mxu0 0
    %913 = vmatpush2.bf16.msra.mxu0 0
    %914 = vmatprep.subr.bf16.mxu0 0
    %915 = vmatpush2.bf16.msra.mxu0 0
    %916 = vmatprep.subr.bf16.mxu0 0
    %917 = vmatpush2.bf16.msra.mxu0 0
    %918 = vmatprep.subr.bf16.mxu0 0
    %919 = vmatpush2.bf16.msra.mxu0 0
    %920 = vmatprep.subr.bf16.mxu0 0
    %921 = vmatpush2.bf16.msra.mxu0 0
    %922 = vmatprep.subr.bf16.mxu0 0
    %923 = vmatpush2.bf16.msra.mxu0 0
    %924 = vmatprep.mubr.bf16.mxu0 0
    %925 = vmatmul.mubr.bf16.gmra.mxu0 %v813
    %v926 = vpop.f32.mrf.mxu0
    %v927 = vadd.f32 %v842, %v926
    %v928 = vpop.f32.mrf.mxu0
    %v929 = vpop.f32.mrf.mxu0
    %v930 = vadd.f32 %v842, %v929
    %v931 = vpop.f32.mrf.mxu0
    %932 = vmatprep.mubr.bf16.mxu0 0
    %933 = vmatmul.mubr.bf16.gmra.mxu0 %v814
    %v934 = vpop.f32.mrf.mxu0
    %v935 = vadd.f32 %v842, %v934
    %v936 = vpop.f32.mrf.mxu0
    %v937 = vpop.f32.mrf.mxu0
    %v938 = vadd.f32 %v842, %v937
    %v939 = vpop.f32.mrf.mxu0
    %940 = vmatprep.mubr.bf16.mxu0 0
    %941 = vmatmul.mubr.bf16.gmra.mxu0 %v815
    %v942 = vpop.f32.mrf.mxu0
    %v943 = vadd.f32 %v842, %v942
    %v944 = vpop.f32.mrf.mxu0
    %v945 = vpop.f32.mrf.mxu0
    %v946 = vadd.f32 %v842, %v945
    %v947 = vpop.f32.mrf.mxu0
    %948 = vmatprep.mubr.bf16.mxu0 0
    %949 = vmatmul.mubr.bf16.gmra.mxu0 %v816
    %v950 = vpop.f32.mrf.mxu0
    %v951 = vadd.f32 %v842, %v950
    %v952 = vpop.f32.mrf.mxu0
    %v953 = vpop.f32.mrf.mxu0
    %v954 = vadd.f32 %v842, %v953
    %v955 = vpop.f32.mrf.mxu0
    %956 = vmatprep.mubr.bf16.mxu0 0
    %957 = vmatmul.mubr.bf16.gmra.mxu0 %v817
    %v958 = vpop.f32.mrf.mxu0
    %v959 = vadd.f32 %v842, %v958
    %v960 = vpop.f32.mrf.mxu0
    %v961 = vpop.f32.mrf.mxu0
    %v962 = vadd.f32 %v842, %v961
    %v963 = vpop.f32.mrf.mxu0
    %964 = vmatprep.mubr.bf16.mxu0 0
    %965 = vmatmul.mubr.bf16.gmra.mxu0 %v818
    %v966 = vpop.f32.mrf.mxu0
    %v967 = vadd.f32 %v842, %v966
    %v968 = vpop.f32.mrf.mxu0
    %v969 = vpop.f32.mrf.mxu0
    %v970 = vadd.f32 %v842, %v969
    %v971 = vpop.f32.mrf.mxu0
    %972 = vmatprep.mubr.bf16.mxu0 0
    %973 = vmatmul.mubr.bf16.gmra.mxu0 %v819
    %v974 = vpop.f32.mrf.mxu0
    %v975 = vadd.f32 %v842, %v974
    %v976 = vpop.f32.mrf.mxu0
    %v977 = vpop.f32.mrf.mxu0
    %v978 = vadd.f32 %v842, %v977
    %v979 = vpop.f32.mrf.mxu0
    %980 = vmatprep.mubr.bf16.mxu0 0
    %981 = vmatmul.mubr.bf16.gmra.mxu0 %v820
    %v982 = vpop.f32.mrf.mxu0
    %v983 = vadd.f32 %v842, %v982
    %v984 = vpop.f32.mrf.mxu0
    %v985 = vpop.f32.mrf.mxu0
    %v986 = vadd.f32 %v842, %v985
    %v987 = vpop.f32.mrf.mxu0
    %988 = vdwg.mxu0
    %989 = vst [vmem:[#allocation11] sm:$0xff] %v927
    %990 = vst [vmem:[#allocation11 + $0x8] sm:$0xff] %v930
    %991 = vst [vmem:[#allocation11 + $0x10] sm:$0xff] %v935
    %992 = vst [vmem:[#allocation11 + $0x18] sm:$0xff] %v938
    %993 = vst [vmem:[#allocation11 + $0x20] sm:$0xff] %v943
    %994 = vst [vmem:[#allocation11 + $0x28] sm:$0xff] %v946
    %995 = vst [vmem:[#allocation11 + $0x30] sm:$0xff] %v951
    %996 = vst [vmem:[#allocation11 + $0x38] sm:$0xff] %v954
    %997 = vst [vmem:[#allocation11 + $0x40] sm:$0xff] %v959
    %998 = vst [vmem:[#allocation11 + $0x48] sm:$0xff] %v962
    %999 = vst [vmem:[#allocation11 + $0x50] sm:$0xff] %v967
    %1000 = vst [vmem:[#allocation11 + $0x58] sm:$0xff] %v970
    %1001 = vst [vmem:[#allocation11 + $0x60] sm:$0xff] %v975
    %1002 = vst [vmem:[#allocation11 + $0x68] sm:$0xff] %v978
    %1003 = vst [vmem:[#allocation11 + $0x70] sm:$0xff] %v983
    %1004 = vst [vmem:[#allocation11 + $0x78] sm:$0xff] %v986
    // Predicated region
    $region54: #{tpu_custom_call.1} parent=1 // pred_check
      _
    $region55: #{tpu_custom_call.1} parent=1 // pred_check_branch
      %1006 = sbr.rel (0) target = $region57
    $region56: #{tpu_custom_call.1} parent=1 // pred_region
      %s1008 = ssub.s32 2048, 2048
      %1009 = vsyncadd [#allocation4], %s1008
      %s1010 = sshll.u32 [#allocation11], 4
      %s1011 = int_to_ptr.vmem [resolvable:$true] %s1010
      %1016 = dma.vmem_to_hbm [thread:$0]  %s1011, 2048, %s8, [#allocation4], 128, 128, 8
    $region57: #{tpu_custom_call.1} parent=1 // pred_fallthru
      _
    // Predicated region
    $region58: #{tpu_custom_call.1} parent=1 // pred_check
      _
    $region59: #{tpu_custom_call.1} parent=1 // pred_check_branch
      %1018 = sbr.rel (0) target = $region61
    $region60: #{tpu_custom_call.1} parent=1 // pred_region
      %1019 = dma.done [#allocation4], 2048
    $region61: #{tpu_custom_call.1} parent=1 // pred_fallthru
      _
    %1020 = vsyncpa [#allocation3], 1
    %1021 = vsyncpa [#allocation6], 1
    %1022 = vsyncpa [#allocation9], 1
    %1023 = vsyncpa [#allocation4], 1

</llo_original>
